<compile_context>
chip_gen: v5e
topology: v5e:2x2
jax: 0.10.0
libtpu: 0.0.40
codegen_flags: <defaults>
</compile_context>

<pallas_src>
import functools

import jax
import jax.numpy as jnp
from jax import lax
from jax.experimental import pallas as pl
from jax.experimental.pallas import tpu as pltpu

BN_EPS = 1e-5
_LANE = 128   # channel dims are padded to a multiple of the 128-lane width
_TM = 1024    # target M-tile for the pointwise matmuls (multiple of 8)


def _round_up(x, m):
    return -(-x // m) * m


def _pad_axis(x, axis, mult):
    size = x.shape[axis]
    pad = _round_up(size, mult) - size
    if pad == 0:
        return x
    cfg = [(0, 0)] * x.ndim
    cfg[axis] = (0, pad)
    return jnp.pad(x, cfg)


@functools.lru_cache(maxsize=None)
def _vmem_limit():
    # Use up to half the physical VMEM for the pipeline: ~64 MiB on v5e/v6e
    # (128 MiB physical), 32 MiB on v7x (64 MiB physical).
    try:
        cap = pltpu.get_tpu_info().vmem_capacity_bytes
    except Exception:  # conservative fallback if the query is unavailable
        cap = 64 * 1024 * 1024
    return int(min(96 * 1024 * 1024, max(32 * 1024 * 1024, cap // 2)))


def _choose_tiling(m, target=_TM):
    """Pick an M-tile; prefer one dividing M exactly (no tail-pad HBM pass)."""
    if m % 8 == 0:
        t = (min(target, m) // 8) * 8
        floor_t = max(8, min(target // 8, m))
        while t >= floor_t:
            if m % t == 0:
                return t, m
            t -= 8
    # TODO(synk): mask the ragged tail tile in-kernel instead of padding.
    tm = min(target, _round_up(m, 8))
    return tm, _round_up(m, tm)


# --------------------------------------------------------------------------
# Kernels
# --------------------------------------------------------------------------
def _matmul_bias_act_kernel(x_ref, w_ref, b_ref, o_ref, *, apply_relu):
    # x: (tm, Cin_p) bf16, w: (Cin_p, Cout_p) bf16 (BN folded), b: (1, Cout_p) f32
    y = jnp.dot(x_ref[...], w_ref[...], preferred_element_type=jnp.float32)
    y = y + b_ref[...]
    if apply_relu:
        y = jnp.maximum(y, 0.0)
    o_ref[...] = y.astype(o_ref.dtype)


def _matmul_bias_add_relu_kernel(x_ref, w_ref, b_ref, r_ref, o_ref):
    # o = relu(x @ w + bias + residual); residual add stays in f32.
    y = jnp.dot(x_ref[...], w_ref[...], preferred_element_type=jnp.float32)
    y = y + b_ref[...] + r_ref[...].astype(jnp.float32)
    o_ref[...] = jnp.maximum(y, 0.0).astype(o_ref.dtype)


def _pointwise_strided_kernel(x_ref, w_ref, b_ref, o_ref, *, stride, w_out):
    # Strided 1x1 conv (downsample path).  The output-row grid index_map has
    # already selected input row stride*r; the W stride is a strided VMEM read.
    # x_ref: (1, 1, W, Cin_p) bf16, w_ref: (Cin_p, Cout_p) bf16, b: (1, Cout_p)
    xs = x_ref[0, 0, pl.ds(0, w_out, stride=stride), :]      # (w_out, Cin_p)
    y = jnp.dot(xs, w_ref[...], preferred_element_type=jnp.float32)
    o_ref[0, 0] = (y + b_ref[...]).astype(o_ref.dtype)


def _conv3x3_bias_relu_kernel(x_ref, w_ref, b_ref, o_ref, acc_ref, *,
                              stride, h_out, w_out):
    # One batch element per grid step.
    # x_ref: (s*s, Hq, Wq, Cin_p) bf16  phase-decomposed, zero-padded NHWC input
    # w_ref: (3, 3, Cin_p, Cout_p) bf16, BN scale folded
    # b_ref: (1, Cout_p)           f32
    # o_ref: (1, h_out*w_out, Cout_p) bf16
    # acc_ref: VMEM scratch (h_out*w_out, Cout_p) f32
    #
    # Taps are grouped per kh row so the accumulator sees only 3 writes /
    # 2 reads per step (no zeros-init) instead of 10 full-tile RMWs.
    s = stride
    cin = x_ref.shape[-1]
    hw = h_out * w_out
    for kh in range(3):
        row_acc = None
        for kw in range(3):
            # Strided conv: tap (kh, kw) reads phase (kh%s, kw%s) at a
            # unit-stride window -> no strided gathers, no wasted FLOPs.
            patch = x_ref[(kh % s) * s + (kw % s),
                          kh // s: kh // s + h_out,
                          kw // s: kw // s + w_out, :]
            # TODO(synk): contract without the per-tap flatten copy once
            # Mosaic supports the 3-D channel contraction directly.
            d = jnp.dot(patch.reshape(hw, cin), w_ref[kh, kw],
                        preferred_element_type=jnp.float32)
            row_acc = d if row_acc is None else row_acc + d
        if kh == 0:
            acc_ref[...] = row_acc
        else:
            acc_ref[...] += row_acc
    o_ref[0] = jnp.maximum(acc_ref[...] + b_ref[...], 0.0).astype(o_ref.dtype)


# --------------------------------------------------------------------------
# Wrappers (glue: folding, padding, reshapes, transposes, phase decomposition)
# --------------------------------------------------------------------------
def _fold_bn(gamma, beta, mean, var, eps=BN_EPS):
    scale = gamma / jnp.sqrt(var + eps)
    bias = beta - mean * scale
    return scale, bias


def _prep_weight(w, scale):
    # Fold per-output-channel BN scale into the conv weight (last axis = Cout),
    # pad Cin/Cout to lane multiples, cast to bf16 (f32 accumulation in-kernel).
    w = w * scale
    w = _pad_axis(w, -1, _LANE)
    w = _pad_axis(w, -2, _LANE)
    return w.astype(jnp.bfloat16)


def _prep_bias(bias):
    return _pad_axis(bias, -1, _LANE).reshape(1, -1).astype(jnp.float32)


def _pointwise_call(kernel, xm, w_bf16, bias, residual=None, *, out_dtype):
    """Tiled (M, Cin_p) @ (Cin_p, Cout_p) matmul with fused bias/act epilogue."""
    m, cin = xm.shape
    cout = w_bf16.shape[-1]
    tm, m_pad = _choose_tiling(m)
    if m_pad != m:
        xm = jnp.pad(xm, ((0, m_pad - m), (0, 0)))
        if residual is not None:
            residual = jnp.pad(residual, ((0, m_pad - m), (0, 0)))

    in_specs = [
        pl.BlockSpec((tm, cin), lambda i: (i, 0)),
        # TODO(synk): pipeline_mode=pl.Buffered(1) on the constant weight/bias
        # blocks to reclaim double-buffer VMEM on v7x.
        pl.BlockSpec((cin, cout), lambda i: (0, 0)),
        pl.BlockSpec((1, cout), lambda i: (0, 0)),
    ]
    args = [xm, w_bf16, bias]
    if residual is not None:
        in_specs.append(pl.BlockSpec((tm, cout), lambda i: (i, 0)))
        args.append(residual)

    out = pl.pallas_call(
        kernel,
        out_shape=jax.ShapeDtypeStruct((m_pad, cout), out_dtype),
        grid=(m_pad // tm,),
        in_specs=in_specs,
        out_specs=pl.BlockSpec((tm, cout), lambda i: (i, 0)),
        compiler_params=pltpu.CompilerParams(
            dimension_semantics=("parallel",),
            vmem_limit_bytes=_vmem_limit()),
    )(*args)
    return out[:m] if m_pad != m else out


def pointwise_conv_bn(x_nhwc, w_bf16, bias, *, relu, out_dtype):
    """1x1 conv + folded BN (+ optional ReLU); channels already lane-padded."""
    n, h, w_sp, cin = x_nhwc.shape
    cout = w_bf16.shape[-1]
    xm = x_nhwc.reshape(n * h * w_sp, cin)
    out = _pointwise_call(
        functools.partial(_matmul_bias_act_kernel, apply_relu=relu),
        xm, w_bf16, bias, out_dtype=out_dtype)
    return out.reshape(n, h, w_sp, cout)


def pointwise_conv_bn_strided(x_nhwc, w_bf16, bias, *, stride):
    """Strided 1x1 conv + folded BN (downsample path), stride applied in-kernel."""
    n, h, w_sp, cin = x_nhwc.shape
    cout = w_bf16.shape[-1]
    h_out = (h - 1) // stride + 1
    w_out = (w_sp - 1) // stride + 1
    try:
        return pl.pallas_call(
            functools.partial(_pointwise_strided_kernel,
                              stride=stride, w_out=w_out),
            out_shape=jax.ShapeDtypeStruct((n, h_out, w_out, cout), jnp.float32),
            grid=(n, h_out),
            in_specs=[
                pl.BlockSpec((1, 1, w_sp, cin),
                             lambda b, r: (b, r * stride, 0, 0)),
                pl.BlockSpec((cin, cout), lambda b, r: (0, 0)),
                pl.BlockSpec((1, cout), lambda b, r: (0, 0)),
            ],
            out_specs=pl.BlockSpec((1, 1, w_out, cout),
                                   lambda b, r: (b, r, 0, 0)),
            compiler_params=pltpu.CompilerParams(
                dimension_semantics=("parallel", "parallel"),
                vmem_limit_bytes=_vmem_limit()),
        )(x_nhwc, w_bf16, bias)
    except Exception:
        # Fallback (kept for robustness): wrapper-side strided gather + the
        # unstrided tiled 1x1 kernel.
        xs = x_nhwc[:, ::stride, ::stride, :]
        return pointwise_conv_bn(xs, w_bf16, bias, relu=False,
                                 out_dtype=jnp.float32)


def conv3x3_bn_relu(x_nhwc, w_bf16, bias, *, stride):
    """3x3 conv (padding=1, stride computed directly) + folded BN + ReLU."""
    n, h, w_sp, cin = x_nhwc.shape
    cout = w_bf16.shape[-1]
    s = stride
    h_out = (h - 1) // s + 1
    w_out = (w_sp - 1) // s + 1

    # Zero-pad (padding=1) in bf16 and round padded extents up to a multiple
    # of s, then phase (space-to-depth) decompose so the kernel only needs
    # unit-stride slices per tap and computes exactly the strided output.
    hpp = _round_up(h + 2, s)
    wpp = _round_up(w_sp + 2, s)
    xp = jnp.pad(x_nhwc, ((0, 0), (1, hpp - h - 1), (1, wpp - w_sp - 1), (0, 0)))
    hq, wq = hpp // s, wpp // s
    xph = (xp.reshape(n, hq, s, wq, s, cin)
             .transpose(0, 2, 4, 1, 3, 5)
             .reshape(n * s * s, hq, wq, cin))

    hw = h_out * w_out
    # TODO(synk): add a spatial row-tile grid axis with halo for v7x (2 TCs)
    # and very large H*W*Cin layers.
    out = pl.pallas_call(
        functools.partial(_conv3x3_bias_relu_kernel,
                          stride=s, h_out=h_out, w_out=w_out),
        out_shape=jax.ShapeDtypeStruct((n, hw, cout), jnp.bfloat16),
        grid=(n,),
        in_specs=[
            pl.BlockSpec((s * s, hq, wq, cin), lambda i: (i, 0, 0, 0)),
            pl.BlockSpec((3, 3, cin, cout), lambda i: (0, 0, 0, 0)),
            pl.BlockSpec((1, cout), lambda i: (0, 0)),
        ],
        out_specs=pl.BlockSpec((1, hw, cout), lambda i: (i, 0, 0)),
        scratch_shapes=[pltpu.VMEM((hw, cout), jnp.float32)],
        compiler_params=pltpu.CompilerParams(
            dimension_semantics=("parallel",),
            vmem_limit_bytes=_vmem_limit()),
    )(xph, w_bf16, bias)
    return out  # (n, h_out*w_out, Cout_p) bf16


def bottleneck_forward(x_nchw, params, *, stride):
    """Forward pass matching the PyTorch Bottleneck module (eval-mode BN)."""
    n, cin, h, w_sp = x_nchw.shape
    cout = params["w3"].shape[-1]

    # NCHW -> NHWC, lane-pad channels, cast to bf16 (single fused XLA pass).
    x_nhwc = jnp.transpose(x_nchw, (0, 2, 3, 1))
    x_bf = _pad_axis(x_nhwc, -1, _LANE).astype(jnp.bfloat16)

    s1, b1 = _fold_bn(*params["bn1"])
    w1p, b1p = _prep_weight(params["w1"], s1), _prep_bias(b1)
    y1 = pointwise_conv_bn(x_bf, w1p, b1p, relu=True, out_dtype=jnp.bfloat16)

    s2, b2 = _fold_bn(*params["bn2"])
    w2p, b2p = _prep_weight(params["w2"], s2), _prep_bias(b2)
    y2 = conv3x3_bn_relu(y1, w2p, b2p, stride=stride)   # (n, h2*w2, Cmid_p)

    h2 = (h - 1) // stride + 1
    w2_sp = (w_sp - 1) // stride + 1
    m2 = n * h2 * w2_sp

    if "w_ds" in params:   # in_channels != out_channels * expansion
        sd, bd = _fold_bn(*params["bn_ds"])
        wdp, bdp = _prep_weight(params["w_ds"], sd), _prep_bias(bd)
        if stride != 1:
            shortcut = pointwise_conv_bn_strided(x_bf, wdp, bdp, stride=stride)
        else:
            shortcut = pointwise_conv_bn(x_bf, wdp, bdp, relu=False,
                                         out_dtype=jnp.float32)
    else:                  # nn.Identity()
        if stride != 1:
            raise ValueError("identity shortcut requires stride == 1")
        if cin != cout:
            raise ValueError("identity shortcut requires cin == cout")
        shortcut = _pad_axis(x_nhwc, -1, _LANE)          # exact f32 residual

    s3, b3 = _fold_bn(*params["bn3"])
    w3p, b3p = _prep_weight(params["w3"], s3), _prep_bias(b3)
    cout_p = w3p.shape[-1]
    cmid_p = w3p.shape[-2]

    out = _pointwise_call(
        _matmul_bias_add_relu_kernel,
        y2.reshape(m2, cmid_p), w3p, b3p,
        residual=shortcut.reshape(m2, cout_p),
        out_dtype=jnp.float32)

    out = out.reshape(n, h2, w2_sp, cout_p)[..., :cout]
    return jnp.transpose(out, (0, 3, 1, 2))  # NHWC -> NCHW


# --------------------------------------------------------------------------
# Deterministic parameter init + pure-JAX reference for verification
# --------------------------------------------------------------------------
def init_params(key, cin, cmid, cout):
    keys = iter(jax.random.split(key, 20))

    def w(shape):
        return 0.1 * jax.random.normal(next(keys), shape, jnp.float32)

    def bn(c):
        gamma = 1.0 + 0.1 * jax.random.normal(next(keys), (c,), jnp.float32)
        beta = 0.1 * jax.random.normal(next(keys), (c,), jnp.float32)
        mean = 0.1 * jax.random.normal(next(keys), (c,), jnp.float32)
        var = 0.5 + jnp.abs(jax.random.normal(next(keys), (c,), jnp.float32))
        return (gamma, beta, mean, var)

    return {
        "w1": w((cin, cmid)),        "bn1": bn(cmid),
        "w2": w((3, 3, cmid, cmid)), "bn2": bn(cmid),
        "w3": w((cmid, cout)),       "bn3": bn(cout),
        "w_ds": w((cin, cout)),      "bn_ds": bn(cout),
    }


def reference_forward(x_nchw, p, stride):
    def conv(x, w_hwio, s, padding):
        return lax.conv_general_dilated(
            x, w_hwio, window_strides=(s, s), padding=padding,
            dimension_numbers=("NCHW", "HWIO", "NCHW"),
            precision=lax.Precision.HIGHEST)

    def bn(x, bnp):
        g, b, m, v = bnp
        inv = g / jnp.sqrt(v + BN_EPS)
        return x * inv[None, :, None, None] + (b - m * inv)[None, :, None, None]

    w1 = p["w1"].reshape(1, 1, *p["w1"].shape)
    w3 = p["w3"].reshape(1, 1, *p["w3"].shape)
    wd = p["w_ds"].reshape(1, 1, *p["w_ds"].shape)

    y = jax.nn.relu(bn(conv(x_nchw, w1, 1, "VALID"), p["bn1"]))
    y = jax.nn.relu(bn(conv(y, p["w2"], stride, [(1, 1), (1, 1)]), p["bn2"]))
    y = bn(conv(y, w3, 1, "VALID"), p["bn3"])
    shortcut = bn(conv(x_nchw, wd, stride, "VALID"), p["bn_ds"])
    return jax.nn.relu(y + shortcut)


# --------------------------------------------------------------------------
if __name__ == "__main__":
    # Bottleneck(in_channels=4, out_channels=8, stride=2, expansion=2)
    IN_C, MID_C, EXPANSION, STRIDE = 4, 8, 2, 2
    OUT_C = MID_C * EXPANSION

    key = jax.random.PRNGKey(0)
    k_x, k_p = jax.random.split(key)
    x = jax.random.normal(k_x, (2, IN_C, 16, 16), jnp.float32)  # NCHW
    params = init_params(k_p, IN_C, MID_C, OUT_C)

    out = bottleneck_forward(x, params, stride=STRIDE)
    out = jax.block_until_ready(out)

    ref = reference_forward(x, params, STRIDE)
    assert out.shape == ref.shape, (out.shape, ref.shape)
    # bf16-operand / f32-accumulate MXU matmuls (bf16 inter-stage activations)
    # vs. an f32 HIGHEST reference: validate at 1e-2 (typical max-abs err is
    # a few 1e-3; the residual add and final output stay in f32).
    max_err = float(jnp.max(jnp.abs(out - ref)))
    if not jnp.allclose(out, ref, atol=1e-2, rtol=1e-2):
        raise AssertionError(f"kernel/reference mismatch, max abs err {max_err}")

    print("KERNEL_OK")
</pallas_src>

<mosaic_0001>
module attributes {stable_mosaic.version = 11 : i64} {
  func.func @_matmul_bias_act_kernel(%arg0: i32, %arg1: memref<512x128xbf16, #tpu.memory_space<vmem>>, %arg2: memref<128x128xbf16, #tpu.memory_space<vmem>>, %arg3: memref<1x128xf32, #tpu.memory_space<vmem>>, %arg4: memref<512x128xbf16, #tpu.memory_space<vmem>>) attributes {dimension_semantics = [#tpu.dimension_semantics<parallel>], iteration_bounds = array<i64: 1>, scalar_prefetch = 0 : i64, scratch_operands = 0 : i64, tpu.core_type = #tpu.core_type<tc>, window_params = [{transform_indices = @transform_0, window_bounds = array<i64: 512, 128>}, {pipeline_mode = #tpu.pipeline_mode<synchronous>, transform_indices = @transform_1, window_bounds = array<i64: 128, 128>}, {pipeline_mode = #tpu.pipeline_mode<synchronous>, transform_indices = @transform_2, window_bounds = array<i64: 1, 128>}, {transform_indices = @transform_3, window_bounds = array<i64: 512, 128>}]} {
    %c0 = arith.constant 0 : index
    %c0_0 = arith.constant 0 : index
    %0 = vector.load %arg1[%c0, %c0_0] : memref<512x128xbf16, #tpu.memory_space<vmem>>, vector<512x128xbf16>
    %c0_1 = arith.constant 0 : index
    %c0_2 = arith.constant 0 : index
    %1 = vector.load %arg2[%c0_1, %c0_2] : memref<128x128xbf16, #tpu.memory_space<vmem>>, vector<128x128xbf16>
    %cst = arith.constant dense<0.000000e+00> : vector<512x128xf32>
    %2 = tpu.matmul %0, %1, %cst {dimension_numbers = #tpu.dot_dimension_numbers<[1], [0], [0], [1], [0, 0, 1, 1], [], []>} : vector<512x128xbf16>, vector<128x128xbf16>, vector<512x128xf32> -> vector<512x128xf32>
    %c0_3 = arith.constant 0 : index
    %c0_4 = arith.constant 0 : index
    %3 = vector.load %arg3[%c0_3, %c0_4] : memref<1x128xf32, #tpu.memory_space<vmem>>, vector<1x128xf32>
    %4 = vector.broadcast %3 : vector<1x128xf32> to vector<512x128xf32>
    %5 = arith.addf %2, %4 : vector<512x128xf32>
    %cst_5 = arith.constant 0.000000e+00 : f32
    %6 = vector.broadcast %cst_5 : f32 to vector<512x128xf32>
    %7 = arith.maximumf %5, %6 : vector<512x128xf32>
    %8 = arith.truncf %7 : vector<512x128xf32> to vector<512x128xbf16>
    %c0_6 = arith.constant 0 : index
    %c0_7 = arith.constant 0 : index
    %9 = vector.load %arg4[%c0_6, %c0_7] : memref<512x128xbf16, #tpu.memory_space<vmem>>, vector<512x128xbf16>
    tpu.vector_store %arg4[%c0_6, %c0_7], %8 {strides = array<i32>} : memref<512x128xbf16, #tpu.memory_space<vmem>>, vector<512x128xbf16>,
    return
  }
  func.func @transform_0(%arg0: i32) -> (i32, i32) {
    %c0_i32 = arith.constant 0 : i32
    %c0_i32_0 = arith.constant 0 : i32
    return %arg0, %c0_i32 : i32, i32
  }
  func.func @transform_1(%arg0: i32) -> (i32, i32) {
    %c0_i32 = arith.constant 0 : i32
    %c0_i32_0 = arith.constant 0 : i32
    %c0_i32_1 = arith.constant 0 : i32
    return %c0_i32, %c0_i32_0 : i32, i32
  }
  func.func @transform_2(%arg0: i32) -> (i32, i32) {
    %c0_i32 = arith.constant 0 : i32
    %c0_i32_0 = arith.constant 0 : i32
    %c0_i32_1 = arith.constant 0 : i32
    return %c0_i32, %c0_i32_0 : i32, i32
  }
  func.func @transform_3(%arg0: i32) -> (i32, i32) {
    %c0_i32 = arith.constant 0 : i32
    %c0_i32_0 = arith.constant 0 : i32
    return %arg0, %c0_i32 : i32, i32
  }
}

</mosaic_0001>

<llo_original>
// kernel: tpu_custom_call.1
$region0: #{tpu_custom_call.1}
  #allocation0 [shape = 'u32[]', space=smem, size = 0x4, offset = 0x4, fixed_abs, tag = 'smem constant byte address 0x4 - core index']
  #allocation1 [shape = 'u32[72,128]{1,0:T(1,128)}', space=vmem, size = 0x9000, scoped, tag = 'internal scratch']
  %s0 = inlined_call_operand.hbm [shape: bf16[512,128], index: 0, kind: input, shape index: {}]
  %s1 = inlined_call_operand.hbm [shape: bf16[128,128], index: 1, kind: input, shape index: {}]
  %s2 = inlined_call_operand.vmem [shape: f32[1,128], index: 2, kind: input, shape index: {}]
  %s3 = inlined_call_operand.hbm [shape: bf16[512,128], index: 3, kind: output, shape index: {}]
  %s4 = sld [smem:[#allocation0]]
  $region30: #{tpu_custom_call.1} parent=0
    _
  %s6 = ssub.s32 1, %s4
  %s7 = scalar_select 0, %s6, %s4
  $region1: #{tpu_custom_call.1} parent=0
    #allocation2 [shape = 'u8[131072]{0}', space=vmem, size = 0x20000, scoped, tag = 'input window, operand 0, single buffered']
    #allocation3 [shape = 's32[1]{0}', space=sflag, size = 0x4, scoped, tag = 'scoped memory for tpu_custom_call.1']
    #allocation4 [shape = 's32[1]{0}', space=sflag, size = 0x4, scoped, tag = 'scoped memory for tpu_custom_call.1']
    #allocation5 [shape = 'u8[32768]{0}', space=vmem, size = 0x8000, scoped, tag = 'input window, operand 1, single buffered']
    #allocation6 [shape = 's32[1]{0}', space=sflag, size = 0x4, scoped, tag = 'scoped memory for tpu_custom_call.1']
    #allocation7 [shape = 'u8[131072]{0}', space=vmem, size = 0x20000, scoped, tag = 'output window, operand 0, single buffered']
    %8 = vsyncpa [#allocation3], 0
    %9 = vsyncpa [#allocation6], 0
    %10 = vsyncpa [#allocation4], 0
    // Predicated region
    $region2: #{tpu_custom_call.1} parent=1 // pred_check
      _
    $region3: #{tpu_custom_call.1} parent=1 // pred_check_branch
      %12 = sbr.rel (0) target = $region5
    $region4: #{tpu_custom_call.1} parent=1 // pred_region
      %14 = vsyncadd [#allocation3], 0
      %s15 = sshll.u32 %s0, 4
      %s16 = int_to_ptr.hbm [resolvable:$true] %s15
      %s17 = sshll.u32 [#allocation2], 4
      %s18 = int_to_ptr.vmem [resolvable:$true] %s17
      %23 = dma.hbm_to_vmem [thread:$0]  %s16, 4096, %s18, [#allocation3], 64, 64, 4
    $region5: #{tpu_custom_call.1} parent=1 // pred_fallthru
      _
    // Predicated region
    $region6: #{tpu_custom_call.1} parent=1 // pred_check
      _
    $region7: #{tpu_custom_call.1} parent=1 // pred_check_branch
      %25 = sbr.rel (0) target = $region9
    $region8: #{tpu_custom_call.1} parent=1 // pred_region
      %27 = vsyncadd [#allocation6], 0
      %s28 = sshll.u32 %s1, 4
      %s29 = int_to_ptr.hbm [resolvable:$true] %s28
      %s30 = sshll.u32 [#allocation5], 4
      %s31 = int_to_ptr.vmem [resolvable:$true] %s30
      %36 = dma.hbm_to_vmem [thread:$0]  %s29, 1024, %s31, [#allocation6], 64, 64, 4
    $region9: #{tpu_custom_call.1} parent=1 // pred_fallthru
      _
    // Predicated region
    $region10: #{tpu_custom_call.1} parent=1 // pred_check
      _
    $region11: #{tpu_custom_call.1} parent=1 // pred_check_branch
      %38 = sbr.rel (0) target = $region13
    $region12: #{tpu_custom_call.1} parent=1 // pred_region
      _
    $region13: #{tpu_custom_call.1} parent=1 // pred_fallthru
      _
    // Predicated region
    $region14: #{tpu_custom_call.1} parent=1 // pred_check
      _
    $region15: #{tpu_custom_call.1} parent=1 // pred_check_branch
      %40 = sbr.rel (0) target = $region17
    $region16: #{tpu_custom_call.1} parent=1 // pred_region
      %42 = dma.done [#allocation3], 4096
    $region17: #{tpu_custom_call.1} parent=1 // pred_fallthru
      _
    // Predicated region
    $region18: #{tpu_custom_call.1} parent=1 // pred_check
      _
    $region19: #{tpu_custom_call.1} parent=1 // pred_check_branch
      %44 = sbr.rel (0) target = $region21
    $region20: #{tpu_custom_call.1} parent=1 // pred_region
      %46 = dma.done [#allocation6], 1024
    $region21: #{tpu_custom_call.1} parent=1 // pred_fallthru
      _
    %v47 = vld [vmem:[#allocation2] sm:$0xf]
    %v48 = vld [vmem:[#allocation2 + $0x4] sm:$0xf]
    %v49 = vld [vmem:[#allocation2 + $0x8] sm:$0xf]
    %v50 = vld [vmem:[#allocation2 + $0xc] sm:$0xf]
    %v51 = vld [vmem:[#allocation2 + $0x10] sm:$0xf]
    %v52 = vld [vmem:[#allocation2 + $0x14] sm:$0xf]
    %v53 = vld [vmem:[#allocation2 + $0x18] sm:$0xf]
    %v54 = vld [vmem:[#allocation2 + $0x1c] sm:$0xf]
    %v55 = vld [vmem:[#allocation2 + $0x20] sm:$0xf]
    %v56 = vld [vmem:[#allocation2 + $0x24] sm:$0xf]
    %v57 = vld [vmem:[#allocation2 + $0x28] sm:$0xf]
    %v58 = vld [vmem:[#allocation2 + $0x2c] sm:$0xf]
    %v59 = vld [vmem:[#allocation2 + $0x30] sm:$0xf]
    %v60 = vld [vmem:[#allocation2 + $0x34] sm:$0xf]
    %v61 = vld [vmem:[#allocation2 + $0x38] sm:$0xf]
    %v62 = vld [vmem:[#allocation2 + $0x3c] sm:$0xf]
    %v63 = vld [vmem:[#allocation2 + $0x40] sm:$0xf]
    %v64 = vld [vmem:[#allocation2 + $0x44] sm:$0xf]
    %v65 = vld [vmem:[#allocation2 + $0x48] sm:$0xf]
    %v66 = vld [vmem:[#allocation2 + $0x4c] sm:$0xf]
    %v67 = vld [vmem:[#allocation2 + $0x50] sm:$0xf]
    %v68 = vld [vmem:[#allocation2 + $0x54] sm:$0xf]
    %v69 = vld [vmem:[#allocation2 + $0x58] sm:$0xf]
    %v70 = vld [vmem:[#allocation2 + $0x5c] sm:$0xf]
    %v71 = vld [vmem:[#allocation2 + $0x60] sm:$0xf]
    %v72 = vld [vmem:[#allocation2 + $0x64] sm:$0xf]
    %v73 = vld [vmem:[#allocation2 + $0x68] sm:$0xf]
    %v74 = vld [vmem:[#allocation2 + $0x6c] sm:$0xf]
    %v75 = vld [vmem:[#allocation2 + $0x70] sm:$0xf]
    %v76 = vld [vmem:[#allocation2 + $0x74] sm:$0xf]
    %v77 = vld [vmem:[#allocation2 + $0x78] sm:$0xf]
    %v78 = vld [vmem:[#allocation2 + $0x7c] sm:$0xf]
    %v79 = vld [vmem:[#allocation2 + $0x80] sm:$0xf]
    %v80 = vld [vmem:[#allocation2 + $0x84] sm:$0xf]
    %v81 = vld [vmem:[#allocation2 + $0x88] sm:$0xf]
    %v82 = vld [vmem:[#allocation2 + $0x8c] sm:$0xf]
    %v83 = vld [vmem:[#allocation2 + $0x90] sm:$0xf]
    %v84 = vld [vmem:[#allocation2 + $0x94] sm:$0xf]
    %v85 = vld [vmem:[#allocation2 + $0x98] sm:$0xf]
    %v86 = vld [vmem:[#allocation2 + $0x9c] sm:$0xf]
    %v87 = vld [vmem:[#allocation2 + $0xa0] sm:$0xf]
    %v88 = vld [vmem:[#allocation2 + $0xa4] sm:$0xf]
    %v89 = vld [vmem:[#allocation2 + $0xa8] sm:$0xf]
    %v90 = vld [vmem:[#allocation2 + $0xac] sm:$0xf]
    %v91 = vld [vmem:[#allocation2 + $0xb0] sm:$0xf]
    %v92 = vld [vmem:[#allocation2 + $0xb4] sm:$0xf]
    %v93 = vld [vmem:[#allocation2 + $0xb8] sm:$0xf]
    %v94 = vld [vmem:[#allocation2 + $0xbc] sm:$0xf]
    %v95 = vld [vmem:[#allocation2 + $0xc0] sm:$0xf]
    %v96 = vld [vmem:[#allocation2 + $0xc4] sm:$0xf]
    %v97 = vld [vmem:[#allocation2 + $0xc8] sm:$0xf]
    %v98 = vld [vmem:[#allocation2 + $0xcc] sm:$0xf]
    %v99 = vld [vmem:[#allocation2 + $0xd0] sm:$0xf]
    %v100 = vld [vmem:[#allocation2 + $0xd4] sm:$0xf]
    %v101 = vld [vmem:[#allocation2 + $0xd8] sm:$0xf]
    %v102 = vld [vmem:[#allocation2 + $0xdc] sm:$0xf]
    %v103 = vld [vmem:[#allocation2 + $0xe0] sm:$0xf]
    %v104 = vld [vmem:[#allocation2 + $0xe4] sm:$0xf]
    %v105 = vld [vmem:[#allocation2 + $0xe8] sm:$0xf]
    %v106 = vld [vmem:[#allocation2 + $0xec] sm:$0xf]
    %v107 = vld [vmem:[#allocation2 + $0xf0] sm:$0xf]
    %v108 = vld [vmem:[#allocation2 + $0xf4] sm:$0xf]
    %v109 = vld [vmem:[#allocation2 + $0xf8] sm:$0xf]
    %v110 = vld [vmem:[#allocation2 + $0xfc] sm:$0xf]
    %v111 = vld [vmem:[#allocation5] sm:$0xf]
    %v112 = vld [vmem:[#allocation5 + $0x4] sm:$0xf]
    %v113 = vld [vmem:[#allocation5 + $0x8] sm:$0xf]
    %v114 = vld [vmem:[#allocation5 + $0xc] sm:$0xf]
    %v115 = vld [vmem:[#allocation5 + $0x10] sm:$0xf]
    %v116 = vld [vmem:[#allocation5 + $0x14] sm:$0xf]
    %v117 = vld [vmem:[#allocation5 + $0x18] sm:$0xf]
    %v118 = vld [vmem:[#allocation5 + $0x1c] sm:$0xf]
    %v119 = vld [vmem:[#allocation5 + $0x20] sm:$0xf]
    %v120 = vld [vmem:[#allocation5 + $0x24] sm:$0xf]
    %v121 = vld [vmem:[#allocation5 + $0x28] sm:$0xf]
    %v122 = vld [vmem:[#allocation5 + $0x2c] sm:$0xf]
    %v123 = vld [vmem:[#allocation5 + $0x30] sm:$0xf]
    %v124 = vld [vmem:[#allocation5 + $0x34] sm:$0xf]
    %v125 = vld [vmem:[#allocation5 + $0x38] sm:$0xf]
    %v126 = vld [vmem:[#allocation5 + $0x3c] sm:$0xf]
    %v127 = vld [vmem:[%s2] sm:$0x1]
    %v129 = vperm.slane %v127, 0
    %v195 = vunpack.c.l.b16 %v47
    %v196 = vunpack.c.l.b16 %v48
    %v197 = vunpack.c.l.b16 %v49
    %v198 = vunpack.c.l.b16 %v50
    %v199 = vunpack.c.l.b16 %v51
    %v200 = vunpack.c.l.b16 %v52
    %v201 = vunpack.c.l.b16 %v53
    %v202 = vunpack.c.l.b16 %v54
    %v203 = vunpack.c.l.b16 %v55
    %v204 = vunpack.c.l.b16 %v56
    %v205 = vunpack.c.l.b16 %v57
    %v206 = vunpack.c.l.b16 %v58
    %v207 = vunpack.c.l.b16 %v59
    %v208 = vunpack.c.l.b16 %v60
    %v209 = vunpack.c.l.b16 %v61
    %v210 = vunpack.c.l.b16 %v62
    %v211 = vunpack.c.l.b16 %v63
    %v212 = vunpack.c.l.b16 %v64
    %v213 = vunpack.c.l.b16 %v65
    %v214 = vunpack.c.l.b16 %v66
    %v215 = vunpack.c.l.b16 %v67
    %v216 = vunpack.c.l.b16 %v68
    %v217 = vunpack.c.l.b16 %v69
    %v218 = vunpack.c.l.b16 %v70
    %v219 = vunpack.c.l.b16 %v71
    %v220 = vunpack.c.l.b16 %v72
    %v221 = vunpack.c.l.b16 %v73
    %v222 = vunpack.c.l.b16 %v74
    %v223 = vunpack.c.l.b16 %v75
    %v224 = vunpack.c.l.b16 %v76
    %v225 = vunpack.c.l.b16 %v77
    %v226 = vunpack.c.l.b16 %v78
    %v227 = vunpack.c.l.b16 %v79
    %v228 = vunpack.c.l.b16 %v80
    %v229 = vunpack.c.l.b16 %v81
    %v230 = vunpack.c.l.b16 %v82
    %v231 = vunpack.c.l.b16 %v83
    %v232 = vunpack.c.l.b16 %v84
    %v233 = vunpack.c.l.b16 %v85
    %v234 = vunpack.c.l.b16 %v86
    %v235 = vunpack.c.l.b16 %v87
    %v236 = vunpack.c.l.b16 %v88
    %v237 = vunpack.c.l.b16 %v89
    %v238 = vunpack.c.l.b16 %v90
    %v239 = vunpack.c.l.b16 %v91
    %v240 = vunpack.c.l.b16 %v92
    %v241 = vunpack.c.l.b16 %v93
    %v242 = vunpack.c.l.b16 %v94
    %v243 = vunpack.c.l.b16 %v95
    %v244 = vunpack.c.l.b16 %v96
    %v245 = vunpack.c.l.b16 %v97
    %v246 = vunpack.c.l.b16 %v98
    %v247 = vunpack.c.l.b16 %v99
    %v248 = vunpack.c.l.b16 %v100
    %v249 = vunpack.c.l.b16 %v101
    %v250 = vunpack.c.l.b16 %v102
    %v251 = vunpack.c.l.b16 %v103
    %v252 = vunpack.c.l.b16 %v104
    %v253 = vunpack.c.l.b16 %v105
    %v254 = vunpack.c.l.b16 %v106
    %v255 = vunpack.c.l.b16 %v107
    %v256 = vunpack.c.l.b16 %v108
    %v257 = vunpack.c.l.b16 %v109
    %v258 = vunpack.c.l.b16 %v110
    %v259 = vpack.c.b16 %v196, %v195
    %v260 = vpack.c.b16 %v198, %v197
    %v261 = vpack.c.b16 %v200, %v199
    %v262 = vpack.c.b16 %v202, %v201
    %v263 = vpack.c.b16 %v204, %v203
    %v264 = vpack.c.b16 %v206, %v205
    %v265 = vpack.c.b16 %v208, %v207
    %v266 = vpack.c.b16 %v210, %v209
    %v267 = vpack.c.b16 %v212, %v211
    %v268 = vpack.c.b16 %v214, %v213
    %v269 = vpack.c.b16 %v216, %v215
    %v270 = vpack.c.b16 %v218, %v217
    %v271 = vpack.c.b16 %v220, %v219
    %v272 = vpack.c.b16 %v222, %v221
    %v273 = vpack.c.b16 %v224, %v223
    %v274 = vpack.c.b16 %v226, %v225
    %v275 = vpack.c.b16 %v228, %v227
    %v276 = vpack.c.b16 %v230, %v229
    %v277 = vpack.c.b16 %v232, %v231
    %v278 = vpack.c.b16 %v234, %v233
    %v279 = vpack.c.b16 %v236, %v235
    %v280 = vpack.c.b16 %v238, %v237
    %v281 = vpack.c.b16 %v240, %v239
    %v282 = vpack.c.b16 %v242, %v241
    %v283 = vpack.c.b16 %v244, %v243
    %v284 = vpack.c.b16 %v246, %v245
    %v285 = vpack.c.b16 %v248, %v247
    %v286 = vpack.c.b16 %v250, %v249
    %v287 = vpack.c.b16 %v252, %v251
    %v288 = vpack.c.b16 %v254, %v253
    %v289 = vpack.c.b16 %v256, %v255
    %v290 = vpack.c.b16 %v258, %v257
    %v339 = vunpack.c.l.b16 %v111
    %v340 = vunpack.c.l.b16 %v112
    %v341 = vunpack.c.l.b16 %v113
    %v342 = vunpack.c.l.b16 %v114
    %v343 = vunpack.c.l.b16 %v115
    %v344 = vunpack.c.l.b16 %v116
    %v345 = vunpack.c.l.b16 %v117
    %v346 = vunpack.c.l.b16 %v118
    %v347 = vunpack.c.l.b16 %v119
    %v348 = vunpack.c.l.b16 %v120
    %v349 = vunpack.c.l.b16 %v121
    %v350 = vunpack.c.l.b16 %v122
    %v351 = vunpack.c.l.b16 %v123
    %v352 = vunpack.c.l.b16 %v124
    %v353 = vunpack.c.l.b16 %v125
    %v354 = vunpack.c.l.b16 %v126
    %v355 = vpack.c.b16 %v340, %v339
    %v356 = vpack.c.b16 %v342, %v341
    %v357 = vpack.c.b16 %v344, %v343
    %v358 = vpack.c.b16 %v346, %v345
    %v359 = vpack.c.b16 %v348, %v347
    %v360 = vpack.c.b16 %v350, %v349
    %v361 = vpack.c.b16 %v352, %v351
    %v362 = vpack.c.b16 %v354, %v353
    %371 = vmatpush.bf16.msra.mxu0 %v362
    %372 = vmatpush.bf16.msra.mxu0 %v361
    %373 = vmatpush.bf16.msra.mxu0 %v360
    %374 = vmatpush.bf16.msra.mxu0 %v359
    %375 = vmatpush.bf16.msra.mxu0 %v358
    %376 = vmatpush.bf16.msra.mxu0 %v357
    %377 = vmatpush.bf16.msra.mxu0 %v356
    %378 = vmatpush.bf16.msra.mxu0 %v355
    %379 = vmatmul.bf16.gmra.mxu0 %v259
    %v380 = vpop.f32.mrf.mxu0
    %v381 = vadd.f32 %v129, %v380
    %v382 = vpop.f32.mrf.mxu0
    %v383 = vadd.f32 %v129, %v382
    %384 = vmatmul.bf16.gmra.mxu0 %v260
    %v385 = vpop.f32.mrf.mxu0
    %v386 = vadd.f32 %v129, %v385
    %v387 = vpop.f32.mrf.mxu0
    %v388 = vadd.f32 %v129, %v387
    %389 = vmatmul.bf16.gmra.mxu0 %v261
    %v390 = vpop.f32.mrf.mxu0
    %v391 = vadd.f32 %v129, %v390
    %v392 = vpop.f32.mrf.mxu0
    %v393 = vadd.f32 %v129, %v392
    %394 = vmatmul.bf16.gmra.mxu0 %v262
    %v395 = vpop.f32.mrf.mxu0
    %v396 = vadd.f32 %v129, %v395
    %v397 = vpop.f32.mrf.mxu0
    %v398 = vadd.f32 %v129, %v397
    %399 = vmatmul.bf16.gmra.mxu0 %v263
    %v400 = vpop.f32.mrf.mxu0
    %v401 = vadd.f32 %v129, %v400
    %v402 = vpop.f32.mrf.mxu0
    %v403 = vadd.f32 %v129, %v402
    %404 = vmatmul.bf16.gmra.mxu0 %v264
    %v405 = vpop.f32.mrf.mxu0
    %v406 = vadd.f32 %v129, %v405
    %v407 = vpop.f32.mrf.mxu0
    %v408 = vadd.f32 %v129, %v407
    %409 = vmatmul.bf16.gmra.mxu0 %v265
    %v410 = vpop.f32.mrf.mxu0
    %v411 = vadd.f32 %v129, %v410
    %v412 = vpop.f32.mrf.mxu0
    %v413 = vadd.f32 %v129, %v412
    %414 = vmatmul.bf16.gmra.mxu0 %v266
    %v415 = vpop.f32.mrf.mxu0
    %v416 = vadd.f32 %v129, %v415
    %v417 = vpop.f32.mrf.mxu0
    %v418 = vadd.f32 %v129, %v417
    %419 = vmatmul.bf16.gmra.mxu0 %v267
    %v420 = vpop.f32.mrf.mxu0
    %v421 = vadd.f32 %v129, %v420
    %v422 = vpop.f32.mrf.mxu0
    %v423 = vadd.f32 %v129, %v422
    %424 = vmatmul.bf16.gmra.mxu0 %v268
    %v425 = vpop.f32.mrf.mxu0
    %v426 = vadd.f32 %v129, %v425
    %v427 = vpop.f32.mrf.mxu0
    %v428 = vadd.f32 %v129, %v427
    %429 = vmatmul.bf16.gmra.mxu0 %v269
    %v430 = vpop.f32.mrf.mxu0
    %v431 = vadd.f32 %v129, %v430
    %v432 = vpop.f32.mrf.mxu0
    %v433 = vadd.f32 %v129, %v432
    %434 = vmatmul.bf16.gmra.mxu0 %v270
    %v435 = vpop.f32.mrf.mxu0
    %v436 = vadd.f32 %v129, %v435
    %v437 = vpop.f32.mrf.mxu0
    %v438 = vadd.f32 %v129, %v437
    %439 = vmatmul.bf16.gmra.mxu0 %v271
    %v440 = vpop.f32.mrf.mxu0
    %v441 = vadd.f32 %v129, %v440
    %v442 = vpop.f32.mrf.mxu0
    %v443 = vadd.f32 %v129, %v442
    %444 = vmatmul.bf16.gmra.mxu0 %v272
    %v445 = vpop.f32.mrf.mxu0
    %v446 = vadd.f32 %v129, %v445
    %v447 = vpop.f32.mrf.mxu0
    %v448 = vadd.f32 %v129, %v447
    %449 = vmatmul.bf16.gmra.mxu0 %v273
    %v450 = vpop.f32.mrf.mxu0
    %v451 = vadd.f32 %v129, %v450
    %v452 = vpop.f32.mrf.mxu0
    %v453 = vadd.f32 %v129, %v452
    %454 = vmatmul.bf16.gmra.mxu0 %v274
    %v455 = vpop.f32.mrf.mxu0
    %v456 = vadd.f32 %v129, %v455
    %v457 = vpop.f32.mrf.mxu0
    %v458 = vadd.f32 %v129, %v457
    %459 = vmatmul.bf16.gmra.mxu0 %v275
    %v460 = vpop.f32.mrf.mxu0
    %v461 = vadd.f32 %v129, %v460
    %v462 = vpop.f32.mrf.mxu0
    %v463 = vadd.f32 %v129, %v462
    %464 = vmatmul.bf16.gmra.mxu0 %v276
    %v465 = vpop.f32.mrf.mxu0
    %v466 = vadd.f32 %v129, %v465
    %v467 = vpop.f32.mrf.mxu0
    %v468 = vadd.f32 %v129, %v467
    %469 = vmatmul.bf16.gmra.mxu0 %v277
    %v470 = vpop.f32.mrf.mxu0
    %v471 = vadd.f32 %v129, %v470
    %v472 = vpop.f32.mrf.mxu0
    %v473 = vadd.f32 %v129, %v472
    %474 = vmatmul.bf16.gmra.mxu0 %v278
    %v475 = vpop.f32.mrf.mxu0
    %v476 = vadd.f32 %v129, %v475
    %v477 = vpop.f32.mrf.mxu0
    %v478 = vadd.f32 %v129, %v477
    %479 = vmatmul.bf16.gmra.mxu0 %v279
    %v480 = vpop.f32.mrf.mxu0
    %v481 = vadd.f32 %v129, %v480
    %v482 = vpop.f32.mrf.mxu0
    %v483 = vadd.f32 %v129, %v482
    %484 = vmatmul.bf16.gmra.mxu0 %v280
    %v485 = vpop.f32.mrf.mxu0
    %v486 = vadd.f32 %v129, %v485
    %v487 = vpop.f32.mrf.mxu0
    %v488 = vadd.f32 %v129, %v487
    %489 = vmatmul.bf16.gmra.mxu0 %v281
    %v490 = vpop.f32.mrf.mxu0
    %v491 = vadd.f32 %v129, %v490
    %v492 = vpop.f32.mrf.mxu0
    %v493 = vadd.f32 %v129, %v492
    %494 = vmatmul.bf16.gmra.mxu0 %v282
    %v495 = vpop.f32.mrf.mxu0
    %v496 = vadd.f32 %v129, %v495
    %v497 = vpop.f32.mrf.mxu0
    %v498 = vadd.f32 %v129, %v497
    %499 = vmatmul.bf16.gmra.mxu0 %v283
    %v500 = vpop.f32.mrf.mxu0
    %v501 = vadd.f32 %v129, %v500
    %v502 = vpop.f32.mrf.mxu0
    %v503 = vadd.f32 %v129, %v502
    %504 = vmatmul.bf16.gmra.mxu0 %v284
    %v505 = vpop.f32.mrf.mxu0
    %v506 = vadd.f32 %v129, %v505
    %v507 = vpop.f32.mrf.mxu0
    %v508 = vadd.f32 %v129, %v507
    %509 = vmatmul.bf16.gmra.mxu0 %v285
    %v510 = vpop.f32.mrf.mxu0
    %v511 = vadd.f32 %v129, %v510
    %v512 = vpop.f32.mrf.mxu0
    %v513 = vadd.f32 %v129, %v512
    %514 = vmatmul.bf16.gmra.mxu0 %v286
    %v515 = vpop.f32.mrf.mxu0
    %v516 = vadd.f32 %v129, %v515
    %v517 = vpop.f32.mrf.mxu0
    %v518 = vadd.f32 %v129, %v517
    %519 = vmatmul.bf16.gmra.mxu0 %v287
    %v520 = vpop.f32.mrf.mxu0
    %v521 = vadd.f32 %v129, %v520
    %v522 = vpop.f32.mrf.mxu0
    %v523 = vadd.f32 %v129, %v522
    %524 = vmatmul.bf16.gmra.mxu0 %v288
    %v525 = vpop.f32.mrf.mxu0
    %v526 = vadd.f32 %v129, %v525
    %v527 = vpop.f32.mrf.mxu0
    %v528 = vadd.f32 %v129, %v527
    %529 = vmatmul.bf16.gmra.mxu0 %v289
    %v530 = vpop.f32.mrf.mxu0
    %v531 = vadd.f32 %v129, %v530
    %v532 = vpop.f32.mrf.mxu0
    %v533 = vadd.f32 %v129, %v532
    %534 = vmatmul.bf16.gmra.mxu0 %v290
    %v535 = vpop.f32.mrf.mxu0
    %v536 = vadd.f32 %v129, %v535
    %v537 = vpop.f32.mrf.mxu0
    %v538 = vadd.f32 %v129, %v537
    %539 = vdwg.mxu0
    %v540 = vmax.f32 %v381, 0.0
    %v541 = vmax.f32 %v383, 0.0
    %v542 = vmax.f32 %v386, 0.0
    %v543 = vmax.f32 %v388, 0.0
    %v544 = vmax.f32 %v391, 0.0
    %v545 = vmax.f32 %v393, 0.0
    %v546 = vmax.f32 %v396, 0.0
    %v547 = vmax.f32 %v398, 0.0
    %v548 = vmax.f32 %v401, 0.0
    %v549 = vmax.f32 %v403, 0.0
    %v550 = vmax.f32 %v406, 0.0
    %v551 = vmax.f32 %v408, 0.0
    %v552 = vmax.f32 %v411, 0.0
    %v553 = vmax.f32 %v413, 0.0
    %v554 = vmax.f32 %v416, 0.0
    %v555 = vmax.f32 %v418, 0.0
    %v556 = vmax.f32 %v421, 0.0
    %v557 = vmax.f32 %v423, 0.0
    %v558 = vmax.f32 %v426, 0.0
    %v559 = vmax.f32 %v428, 0.0
    %v560 = vmax.f32 %v431, 0.0
    %v561 = vmax.f32 %v433, 0.0
    %v562 = vmax.f32 %v436, 0.0
    %v563 = vmax.f32 %v438, 0.0
    %v564 = vmax.f32 %v441, 0.0
    %v565 = vmax.f32 %v443, 0.0
    %v566 = vmax.f32 %v446, 0.0
    %v567 = vmax.f32 %v448, 0.0
    %v568 = vmax.f32 %v451, 0.0
    %v569 = vmax.f32 %v453, 0.0
    %v570 = vmax.f32 %v456, 0.0
    %v571 = vmax.f32 %v458, 0.0
    %v572 = vmax.f32 %v461, 0.0
    %v573 = vmax.f32 %v463, 0.0
    %v574 = vmax.f32 %v466, 0.0
    %v575 = vmax.f32 %v468, 0.0
    %v576 = vmax.f32 %v471, 0.0
    %v577 = vmax.f32 %v473, 0.0
    %v578 = vmax.f32 %v476, 0.0
    %v579 = vmax.f32 %v478, 0.0
    %v580 = vmax.f32 %v481, 0.0
    %v581 = vmax.f32 %v483, 0.0
    %v582 = vmax.f32 %v486, 0.0
    %v583 = vmax.f32 %v488, 0.0
    %v584 = vmax.f32 %v491, 0.0
    %v585 = vmax.f32 %v493, 0.0
    %v586 = vmax.f32 %v496, 0.0
    %v587 = vmax.f32 %v498, 0.0
    %v588 = vmax.f32 %v501, 0.0
    %v589 = vmax.f32 %v503, 0.0
    %v590 = vmax.f32 %v506, 0.0
    %v591 = vmax.f32 %v508, 0.0
    %v592 = vmax.f32 %v511, 0.0
    %v593 = vmax.f32 %v513, 0.0
    %v594 = vmax.f32 %v516, 0.0
    %v595 = vmax.f32 %v518, 0.0
    %v596 = vmax.f32 %v521, 0.0
    %v597 = vmax.f32 %v523, 0.0
    %v598 = vmax.f32 %v526, 0.0
    %v599 = vmax.f32 %v528, 0.0
    %v600 = vmax.f32 %v531, 0.0
    %v601 = vmax.f32 %v533, 0.0
    %v602 = vmax.f32 %v536, 0.0
    %v603 = vmax.f32 %v538, 0.0
    %v604 = vpack.c.bf16 %v540, %v540
    %v605 = vpack.c.bf16 %v541, %v541
    %v606 = vpack.c.bf16 %v542, %v542
    %v607 = vpack.c.bf16 %v543, %v543
    %v608 = vpack.c.bf16 %v544, %v544
    %v609 = vpack.c.bf16 %v545, %v545
    %v610 = vpack.c.bf16 %v546, %v546
    %v611 = vpack.c.bf16 %v547, %v547
    %v612 = vpack.c.bf16 %v548, %v548
    %v613 = vpack.c.bf16 %v549, %v549
    %v614 = vpack.c.bf16 %v550, %v550
    %v615 = vpack.c.bf16 %v551, %v551
    %v616 = vpack.c.bf16 %v552, %v552
    %v617 = vpack.c.bf16 %v553, %v553
    %v618 = vpack.c.bf16 %v554, %v554
    %v619 = vpack.c.bf16 %v555, %v555
    %v620 = vpack.c.bf16 %v556, %v556
    %v621 = vpack.c.bf16 %v557, %v557
    %v622 = vpack.c.bf16 %v558, %v558
    %v623 = vpack.c.bf16 %v559, %v559
    %v624 = vpack.c.bf16 %v560, %v560
    %v625 = vpack.c.bf16 %v561, %v561
    %v626 = vpack.c.bf16 %v562, %v562
    %v627 = vpack.c.bf16 %v563, %v563
    %v628 = vpack.c.bf16 %v564, %v564
    %v629 = vpack.c.bf16 %v565, %v565
    %v630 = vpack.c.bf16 %v566, %v566
    %v631 = vpack.c.bf16 %v567, %v567
    %v632 = vpack.c.bf16 %v568, %v568
    %v633 = vpack.c.bf16 %v569, %v569
    %v634 = vpack.c.bf16 %v570, %v570
    %v635 = vpack.c.bf16 %v571, %v571
    %v636 = vpack.c.bf16 %v572, %v572
    %v637 = vpack.c.bf16 %v573, %v573
    %v638 = vpack.c.bf16 %v574, %v574
    %v639 = vpack.c.bf16 %v575, %v575
    %v640 = vpack.c.bf16 %v576, %v576
    %v641 = vpack.c.bf16 %v577, %v577
    %v642 = vpack.c.bf16 %v578, %v578
    %v643 = vpack.c.bf16 %v579, %v579
    %v644 = vpack.c.bf16 %v580, %v580
    %v645 = vpack.c.bf16 %v581, %v581
    %v646 = vpack.c.bf16 %v582, %v582
    %v647 = vpack.c.bf16 %v583, %v583
    %v648 = vpack.c.bf16 %v584, %v584
    %v649 = vpack.c.bf16 %v585, %v585
    %v650 = vpack.c.bf16 %v586, %v586
    %v651 = vpack.c.bf16 %v587, %v587
    %v652 = vpack.c.bf16 %v588, %v588
    %v653 = vpack.c.bf16 %v589, %v589
    %v654 = vpack.c.bf16 %v590, %v590
    %v655 = vpack.c.bf16 %v591, %v591
    %v656 = vpack.c.bf16 %v592, %v592
    %v657 = vpack.c.bf16 %v593, %v593
    %v658 = vpack.c.bf16 %v594, %v594
    %v659 = vpack.c.bf16 %v595, %v595
    %v660 = vpack.c.bf16 %v596, %v596
    %v661 = vpack.c.bf16 %v597, %v597
    %v662 = vpack.c.bf16 %v598, %v598
    %v663 = vpack.c.bf16 %v599, %v599
    %v664 = vpack.c.bf16 %v600, %v600
    %v665 = vpack.c.bf16 %v601, %v601
    %v666 = vpack.c.bf16 %v602, %v602
    %v667 = vpack.c.bf16 %v603, %v603
    %668 = vst [vmem:[#allocation7] sm:$0xf] %v604
    %669 = vst [vmem:[#allocation7 + $0x4] sm:$0xf] %v605
    %670 = vst [vmem:[#allocation7 + $0x8] sm:$0xf] %v606
    %671 = vst [vmem:[#allocation7 + $0xc] sm:$0xf] %v607
    %672 = vst [vmem:[#allocation7 + $0x10] sm:$0xf] %v608
    %673 = vst [vmem:[#allocation7 + $0x14] sm:$0xf] %v609
    %674 = vst [vmem:[#allocation7 + $0x18] sm:$0xf] %v610
    %675 = vst [vmem:[#allocation7 + $0x1c] sm:$0xf] %v611
    %676 = vst [vmem:[#allocation7 + $0x20] sm:$0xf] %v612
    %677 = vst [vmem:[#allocation7 + $0x24] sm:$0xf] %v613
    %678 = vst [vmem:[#allocation7 + $0x28] sm:$0xf] %v614
    %679 = vst [vmem:[#allocation7 + $0x2c] sm:$0xf] %v615
    %680 = vst [vmem:[#allocation7 + $0x30] sm:$0xf] %v616
    %681 = vst [vmem:[#allocation7 + $0x34] sm:$0xf] %v617
    %682 = vst [vmem:[#allocation7 + $0x38] sm:$0xf] %v618
    %683 = vst [vmem:[#allocation7 + $0x3c] sm:$0xf] %v619
    %684 = vst [vmem:[#allocation7 + $0x40] sm:$0xf] %v620
    %685 = vst [vmem:[#allocation7 + $0x44] sm:$0xf] %v621
    %686 = vst [vmem:[#allocation7 + $0x48] sm:$0xf] %v622
    %687 = vst [vmem:[#allocation7 + $0x4c] sm:$0xf] %v623
    %688 = vst [vmem:[#allocation7 + $0x50] sm:$0xf] %v624
    %689 = vst [vmem:[#allocation7 + $0x54] sm:$0xf] %v625
    %690 = vst [vmem:[#allocation7 + $0x58] sm:$0xf] %v626
    %691 = vst [vmem:[#allocation7 + $0x5c] sm:$0xf] %v627
    %692 = vst [vmem:[#allocation7 + $0x60] sm:$0xf] %v628
    %693 = vst [vmem:[#allocation7 + $0x64] sm:$0xf] %v629
    %694 = vst [vmem:[#allocation7 + $0x68] sm:$0xf] %v630
    %695 = vst [vmem:[#allocation7 + $0x6c] sm:$0xf] %v631
    %696 = vst [vmem:[#allocation7 + $0x70] sm:$0xf] %v632
    %697 = vst [vmem:[#allocation7 + $0x74] sm:$0xf] %v633
    %698 = vst [vmem:[#allocation7 + $0x78] sm:$0xf] %v634
    %699 = vst [vmem:[#allocation7 + $0x7c] sm:$0xf] %v635
    %700 = vst [vmem:[#allocation7 + $0x80] sm:$0xf] %v636
    %701 = vst [vmem:[#allocation7 + $0x84] sm:$0xf] %v637
    %702 = vst [vmem:[#allocation7 + $0x88] sm:$0xf] %v638
    %703 = vst [vmem:[#allocation7 + $0x8c] sm:$0xf] %v639
    %704 = vst [vmem:[#allocation7 + $0x90] sm:$0xf] %v640
    %705 = vst [vmem:[#allocation7 + $0x94] sm:$0xf] %v641
    %706 = vst [vmem:[#allocation7 + $0x98] sm:$0xf] %v642
    %707 = vst [vmem:[#allocation7 + $0x9c] sm:$0xf] %v643
    %708 = vst [vmem:[#allocation7 + $0xa0] sm:$0xf] %v644
    %709 = vst [vmem:[#allocation7 + $0xa4] sm:$0xf] %v645
    %710 = vst [vmem:[#allocation7 + $0xa8] sm:$0xf] %v646
    %711 = vst [vmem:[#allocation7 + $0xac] sm:$0xf] %v647
    %712 = vst [vmem:[#allocation7 + $0xb0] sm:$0xf] %v648
    %713 = vst [vmem:[#allocation7 + $0xb4] sm:$0xf] %v649
    %714 = vst [vmem:[#allocation7 + $0xb8] sm:$0xf] %v650
    %715 = vst [vmem:[#allocation7 + $0xbc] sm:$0xf] %v651
    %716 = vst [vmem:[#allocation7 + $0xc0] sm:$0xf] %v652
    %717 = vst [vmem:[#allocation7 + $0xc4] sm:$0xf] %v653
    %718 = vst [vmem:[#allocation7 + $0xc8] sm:$0xf] %v654
    %719 = vst [vmem:[#allocation7 + $0xcc] sm:$0xf] %v655
    %720 = vst [vmem:[#allocation7 + $0xd0] sm:$0xf] %v656
    %721 = vst [vmem:[#allocation7 + $0xd4] sm:$0xf] %v657
    %722 = vst [vmem:[#allocation7 + $0xd8] sm:$0xf] %v658
    %723 = vst [vmem:[#allocation7 + $0xdc] sm:$0xf] %v659
    %724 = vst [vmem:[#allocation7 + $0xe0] sm:$0xf] %v660
    %725 = vst [vmem:[#allocation7 + $0xe4] sm:$0xf] %v661
    %726 = vst [vmem:[#allocation7 + $0xe8] sm:$0xf] %v662
    %727 = vst [vmem:[#allocation7 + $0xec] sm:$0xf] %v663
    %728 = vst [vmem:[#allocation7 + $0xf0] sm:$0xf] %v664
    %729 = vst [vmem:[#allocation7 + $0xf4] sm:$0xf] %v665
    %730 = vst [vmem:[#allocation7 + $0xf8] sm:$0xf] %v666
    %731 = vst [vmem:[#allocation7 + $0xfc] sm:$0xf] %v667
    // Predicated region
    $region22: #{tpu_custom_call.1} parent=1 // pred_check
      _
    $region23: #{tpu_custom_call.1} parent=1 // pred_check_branch
      %733 = sbr.rel (0) target = $region25
    $region24: #{tpu_custom_call.1} parent=1 // pred_region
      %735 = vsyncadd [#allocation4], 0
      %s736 = sshll.u32 [#allocation7], 4
      %s737 = int_to_ptr.vmem [resolvable:$true] %s736
      %s738 = sshll.u32 %s3, 4
      %s739 = int_to_ptr.hbm [resolvable:$true] %s738
      %744 = dma.vmem_to_hbm [thread:$0]  %s737, 4096, %s739, [#allocation4], 64, 64, 4
    $region25: #{tpu_custom_call.1} parent=1 // pred_fallthru
      _
    // Predicated region
    $region26: #{tpu_custom_call.1} parent=1 // pred_check
      _
    $region27: #{tpu_custom_call.1} parent=1 // pred_check_branch
      %746 = sbr.rel (0) target = $region29
    $region28: #{tpu_custom_call.1} parent=1 // pred_region
      %748 = dma.done [#allocation4], 4096
    $region29: #{tpu_custom_call.1} parent=1 // pred_fallthru
      _
    %749 = vsyncpa [#allocation3], 1
    %750 = vsyncpa [#allocation6], 1
    %751 = vsyncpa [#allocation4], 1

</llo_original>
